<compile_context>
chip_gen: v6e
topology: v6e:2x2x1
jax: 0.10.0
libtpu: 0.0.40
codegen_flags: <defaults>
</compile_context>

<pallas_src>
import functools

import jax
import jax.numpy as jnp
from jax import lax
from jax.experimental import pallas as pl
from jax.experimental.pallas import tpu as pltpu


def _round_up(n, m):
    return -(-n // m) * m


# ----------------------------- Pallas kernel --------------------------------
def _dlinear_rows_kernel(x_ref, w_ref, m_ref, s_ref, out_ref, *, seq_len):
    x = x_ref[...]                            # (TR, L) float32
    m = m_ref[...]                            # (TR, 1)  1.0 => output channel
    w = w_ref[...]                            # (1, L)   effective weight

    # LayerNorm over time (eps=0, elementwise_affine=False), applied only to
    # output-channel rows (non-output rows keep their raw values).
    mean = jnp.mean(x, axis=-1, keepdims=True)
    cent = x - mean
    var = jnp.mean(cent * cent, axis=-1, keepdims=True)
    x = jnp.where(m > 0.0, cent * lax.rsqrt(var), x)

    # x_enc[isinf] = 0 ; x_enc[isnan] = 0
    x = jnp.where(jnp.isfinite(x), x, jnp.float32(0.0))

    # gt = cleaned value at the last time step (wrapper slices output channels).
    last = x[:, seq_len - 1:seq_len]          # (TR, 1)

    # seasonal + trend Linear(L -> 1) with the decomposition folded into w_eff.
    # enc_input zeroes the last time step of output-channel rows, so remove its
    # contribution (m * last * w_eff[L-1]) from the full weighted sum.
    b_eff = s_ref[0, 0]
    w_last = s_ref[0, 1]
    total = jnp.sum(x * w, axis=-1, keepdims=True)          # (TR, 1)

    out_ref[:, 0:1] = total - m * last * w_last + b_eff     # prediction
    out_ref[:, 1:2] = last                                  # gt


# ------------------------------ wrapper --------------------------------------
def _moving_avg_matrix(seq_len, kernel):
    # mm[t] = (1/k) * sum_j enc[clip(t + j - p, 0, L-1)],  p = (k - 1) // 2
    p = (kernel - 1) // 2
    t = jnp.arange(seq_len)[:, None, None]
    j = jnp.arange(kernel)[None, :, None]
    s = jnp.arange(seq_len)[None, None, :]
    src = jnp.clip(t + j - p, 0, seq_len - 1)
    return jnp.sum((src == s).astype(jnp.float32), axis=1) / jnp.float32(kernel)


def dlinear_forward(x_enc, ws, bs, wt, bt, *, out_variate, kernel=3,
                    row_tile=512):
    """x_enc: (B, L, V) float32 (PyTorch layout).  Returns (x_out, gt), each of
    shape (B, 1, out_variate), matching the PyTorch module."""
    B, L, V = x_enc.shape
    R = B * V

    # (B, L, V) -> (B, V, L) -> (R, L): time on lanes, rows batched.
    x_rows = jnp.transpose(x_enc, (0, 2, 1)).reshape(R, L).astype(jnp.float32)

    # Row tile: multiple of 8 sublanes; pad rows to a whole number of tiles.
    tr = max(8, min(int(row_tile), _round_up(R, 8)))
    tr = (tr // 8) * 8
    r_pad = _round_up(R, tr)
    if r_pad != R:
        x_rows = jnp.pad(x_rows, ((0, r_pad - R), (0, 0)))

    # Per-row mask: 1.0 for rows that are (valid) normalized output channels.
    row_ids = jnp.arange(r_pad, dtype=jnp.int32)
    mask = (((row_ids % V) < out_variate) & (row_ids < R)).astype(jnp.float32)
    mask = mask.reshape(r_pad, 1)

    # Fold moving-average decomposition + both linear heads into one weight.
    mov = _moving_avg_matrix(L, kernel)
    ws_f = ws.reshape(L).astype(jnp.float32)
    wt_f = wt.reshape(L).astype(jnp.float32)
    w_eff = ws_f + mov.T @ (wt_f - ws_f)                       # (L,)
    b_eff = (jnp.reshape(bs, ()) + jnp.reshape(bt, ())).astype(jnp.float32)
    scal = jnp.stack([b_eff, w_eff[L - 1]]).reshape(1, 2)      # SMEM scalars

    grid = (r_pad // tr,)
    out = pl.pallas_call(
        functools.partial(_dlinear_rows_kernel, seq_len=L),
        out_shape=jax.ShapeDtypeStruct((r_pad, 2), jnp.float32),
        grid_spec=pltpu.PrefetchScalarGridSpec(
            num_scalar_prefetch=0,
            grid=grid,
            in_specs=[
                pl.BlockSpec((tr, L), lambda i: (i, 0)),            # rows
                pl.BlockSpec((1, L), lambda i: (0, 0)),             # w_eff
                pl.BlockSpec((tr, 1), lambda i: (i, 0)),            # mask
                pl.BlockSpec(memory_space=pltpu.MemorySpace.SMEM),  # [b, w_L-1]
            ],
            out_specs=pl.BlockSpec((tr, 2), lambda i: (i, 0)),
        ),
        compiler_params=pltpu.CompilerParams(
            dimension_semantics=("parallel",)),
    )(x_rows, w_eff.reshape(1, L), mask, scal)

    out = out[:R].reshape(B, V, 2)
    x_out = out[:, :out_variate, 0][:, None, :]                # (B, 1, out_v)
    gt = out[:, :out_variate, 1][:, None, :]                   # (B, 1, out_v)
    return x_out, gt


# -------------------------- pure-JAX reference --------------------------------
def dlinear_ref(x_enc, ws, bs, wt, bt, *, out_variate, kernel=3):
    B, L, V = x_enc.shape
    x = x_enc.astype(jnp.float32)
    sub = jnp.transpose(x[:, :, :out_variate], (0, 2, 1))          # (B, ov, L)
    mean = jnp.mean(sub, -1, keepdims=True)
    var = jnp.mean((sub - mean) ** 2, -1, keepdims=True)
    sub_n = (sub - mean) / jnp.sqrt(var)
    x = x.at[:, :, :out_variate].set(jnp.transpose(sub_n, (0, 2, 1)))
    x = jnp.where(jnp.isfinite(x), x, 0.0)
    gt = x[:, -1:, :out_variate]
    enc = x.at[:, -1:, :out_variate].set(0.0)
    p = (kernel - 1) // 2
    padded = jnp.concatenate(
        [jnp.repeat(enc[:, :1, :], p, axis=1), enc,
         jnp.repeat(enc[:, -1:, :], p, axis=1)], axis=1)
    mm = sum(padded[:, j:j + L, :] for j in range(kernel)) / kernel
    res = enc - mm
    s_in = jnp.transpose(res, (0, 2, 1))                            # (B, V, L)
    t_in = jnp.transpose(mm, (0, 2, 1))
    seasonal = s_in @ ws.reshape(L, 1) + bs                         # (B, V, 1)
    trend = t_in @ wt.reshape(L, 1) + bt
    x_out = jnp.transpose(seasonal + trend, (0, 2, 1))              # (B, 1, V)
    return x_out[:, :, :out_variate], gt


# ------------------------------- main -----------------------------------------
def _run_case(B, L, V, out_v, kernel, row_tile, key):
    k_ws, k_bs, k_wt, k_bt, k_x = jax.random.split(key, 5)
    ws = jax.random.normal(k_ws, (1, L), dtype=jnp.float32) * 0.1
    bs = jax.random.normal(k_bs, (1,), dtype=jnp.float32) * 0.1
    wt = jax.random.normal(k_wt, (1, L), dtype=jnp.float32) * 0.1
    bt = jax.random.normal(k_bt, (1,), dtype=jnp.float32) * 0.1

    x_enc = jax.random.normal(k_x, (B, L, V), dtype=jnp.float32)
    # exercise inf / nan cleanup on non-normalized channels
    x_enc = x_enc.at[0, 3, V - 1].set(jnp.inf)
    x_enc = x_enc.at[B - 1, 1, V - 2].set(jnp.nan)

    x_out, gt = dlinear_forward(x_enc, ws, bs, wt, bt,
                                out_variate=out_v, kernel=kernel,
                                row_tile=row_tile)
    jax.block_until_ready((x_out, gt))

    x_ref, gt_ref = dlinear_ref(x_enc, ws, bs, wt, bt,
                                out_variate=out_v, kernel=kernel)

    assert x_out.shape == (B, 1, out_v) and gt.shape == (B, 1, out_v)
    assert jnp.allclose(x_out, x_ref, rtol=1e-4, atol=1e-5), \
        float(jnp.max(jnp.abs(x_out - x_ref)))
    assert jnp.allclose(gt, gt_ref, rtol=1e-4, atol=1e-5), \
        float(jnp.max(jnp.abs(gt - gt_ref)))


if __name__ == "__main__":
    key = jax.random.PRNGKey(0)

    # tiny config (single row tile, matches the original module example sizes)
    _run_case(B=2, L=16, V=6, out_v=4, kernel=3, row_tile=512,
              key=jax.random.fold_in(key, 0))

    # larger config exercising multiple row tiles + row padding
    _run_case(B=4, L=16, V=40, out_v=24, kernel=3, row_tile=128,
              key=jax.random.fold_in(key, 1))

    print("KERNEL_OK")
</pallas_src>

<mosaic_0001>
module attributes {stable_mosaic.version = 11 : i64} {
  func.func @_dlinear_rows_kernel(%arg0: i32, %arg1: memref<16x16xf32, #tpu.memory_space<vmem>>, %arg2: memref<1x16xf32, #tpu.memory_space<vmem>>, %arg3: memref<16x1xf32, #tpu.memory_space<vmem>>, %arg4: memref<1x2xf32, #tpu.memory_space<smem>>, %arg5: memref<16x2xf32, #tpu.memory_space<vmem>>) attributes {dimension_semantics = [#tpu.dimension_semantics<parallel>], iteration_bounds = array<i64: 1>, scalar_prefetch = 0 : i64, scratch_operands = 0 : i64, tpu.core_type = #tpu.core_type<tc>, window_params = [{transform_indices = @transform_0, window_bounds = array<i64: 16, 16>}, {pipeline_mode = #tpu.pipeline_mode<synchronous>, transform_indices = @transform_1, window_bounds = array<i64: 1, 16>}, {transform_indices = @transform_2, window_bounds = array<i64: 16, 1>}, {transform_indices = @transform_3, window_bounds = array<i64: 1, 2>}, {transform_indices = @transform_4, window_bounds = array<i64: 16, 2>}]} {
    %c0 = arith.constant 0 : index
    %c0_0 = arith.constant 0 : index
    %0 = vector.load %arg1[%c0, %c0_0] : memref<16x16xf32, #tpu.memory_space<vmem>>, vector<16x16xf32>
    %c0_1 = arith.constant 0 : index
    %c0_2 = arith.constant 0 : index
    %1 = vector.load %arg3[%c0_1, %c0_2] : memref<16x1xf32, #tpu.memory_space<vmem>>, vector<16x1xf32>
    %c0_3 = arith.constant 0 : index
    %c0_4 = arith.constant 0 : index
    %2 = vector.load %arg2[%c0_3, %c0_4] : memref<1x16xf32, #tpu.memory_space<vmem>>, vector<1x16xf32>
    %cst = arith.constant dense<0.000000e+00> : vector<16xf32>
    %3 = vector.multi_reduction <add>, %0, %cst [1] : vector<16x16xf32> to vector<16xf32>
    %4 = vector.shape_cast %3 : vector<16xf32> to vector<16x1xf32>
    %cst_5 = arith.constant 1.600000e+01 : f32
    %5 = vector.broadcast %cst_5 : f32 to vector<16x1xf32>
    %6 = arith.divf %4, %5 : vector<16x1xf32>
    %7 = vector.broadcast %6 : vector<16x1xf32> to vector<16x16xf32>
    %8 = arith.subf %0, %7 : vector<16x16xf32>
    %9 = arith.mulf %8, %8 : vector<16x16xf32>
    %cst_6 = arith.constant dense<0.000000e+00> : vector<16xf32>
    %10 = vector.multi_reduction <add>, %9, %cst_6 [1] : vector<16x16xf32> to vector<16xf32>
    %11 = vector.shape_cast %10 : vector<16xf32> to vector<16x1xf32>
    %cst_7 = arith.constant 1.600000e+01 : f32
    %12 = vector.broadcast %cst_7 : f32 to vector<16x1xf32>
    %13 = arith.divf %11, %12 : vector<16x1xf32>
    %cst_8 = arith.constant 0.000000e+00 : f32
    %14 = vector.broadcast %cst_8 : f32 to vector<16x1xf32>
    %15 = arith.cmpf ogt, %1, %14 : vector<16x1xf32>
    %16 = math.rsqrt %13 : vector<16x1xf32>
    %17 = vector.broadcast %16 : vector<16x1xf32> to vector<16x16xf32>
    %18 = arith.mulf %8, %17 : vector<16x16xf32>
    %19 = vector.shape_cast %15 : vector<16x1xi1> to vector<16x1xi1>
    %20 = vector.broadcast %19 : vector<16x1xi1> to vector<16x16xi1>
    %21 = arith.select %20, %18, %0 : vector<16x16xi1>, vector<16x16xf32>
    %22 = tpu.weird %21 : vector<16x16xf32> -> vector<16x16xi1>
    %cst_9 = arith.constant dense<true> : vector<16x16xi1>
    %23 = arith.xori %22, %cst_9 : vector<16x16xi1>
    %cst_10 = arith.constant 0.000000e+00 : f32
    %24 = vector.broadcast %cst_10 : f32 to vector<16x16xf32>
    %25 = arith.select %23, %21, %24 : vector<16x16xi1>, vector<16x16xf32>
    %26 = vector.extract_strided_slice %25 {offsets = [0, 15], sizes = [16, 1], strides = [1, 1]} : vector<16x16xf32> to vector<16x1xf32>
    %c0_11 = arith.constant 0 : index
    %c0_12 = arith.constant 0 : index
    %27 = memref.load %arg4[%c0_11, %c0_12] : memref<1x2xf32, #tpu.memory_space<smem>>
    %c0_13 = arith.constant 0 : index
    %c1 = arith.constant 1 : index
    %28 = memref.load %arg4[%c0_13, %c1] : memref<1x2xf32, #tpu.memory_space<smem>>
    %29 = vector.broadcast %2 : vector<1x16xf32> to vector<16x16xf32>
    %30 = arith.mulf %25, %29 : vector<16x16xf32>
    %cst_14 = arith.constant dense<0.000000e+00> : vector<16xf32>
    %31 = vector.multi_reduction <add>, %30, %cst_14 [1] : vector<16x16xf32> to vector<16xf32>
    %32 = vector.shape_cast %31 : vector<16xf32> to vector<16x1xf32>
    %33 = arith.mulf %1, %26 : vector<16x1xf32>
    %34 = vector.broadcast %28 : f32 to vector<16x1xf32>
    %35 = arith.mulf %33, %34 : vector<16x1xf32>
    %36 = arith.subf %32, %35 : vector<16x1xf32>
    %37 = vector.broadcast %27 : f32 to vector<16x1xf32>
    %38 = arith.addf %36, %37 : vector<16x1xf32>
    %c0_15 = arith.constant 0 : index
    %c0_16 = arith.constant 0 : index
    %39 = vector.load %arg5[%c0_15, %c0_16] : memref<16x2xf32, #tpu.memory_space<vmem>>, vector<16x1xf32>
    tpu.vector_store %arg5[%c0_15, %c0_16], %38 {strides = array<i32>} : memref<16x2xf32, #tpu.memory_space<vmem>>, vector<16x1xf32>,
    %c0_17 = arith.constant 0 : index
    %c1_18 = arith.constant 1 : index
    %40 = vector.load %arg5[%c0_17, %c1_18] : memref<16x2xf32, #tpu.memory_space<vmem>>, vector<16x1xf32>
    tpu.vector_store %arg5[%c0_17, %c1_18], %26 {strides = array<i32>} : memref<16x2xf32, #tpu.memory_space<vmem>>, vector<16x1xf32>,
    return
  }
  func.func @transform_0(%arg0: i32) -> (i32, i32) {
    %c0_i32 = arith.constant 0 : i32
    %c0_i32_0 = arith.constant 0 : i32
    return %arg0, %c0_i32 : i32, i32
  }
  func.func @transform_1(%arg0: i32) -> (i32, i32) {
    %c0_i32 = arith.constant 0 : i32
    %c0_i32_0 = arith.constant 0 : i32
    %c0_i32_1 = arith.constant 0 : i32
    return %c0_i32, %c0_i32_0 : i32, i32
  }
  func.func @transform_2(%arg0: i32) -> (i32, i32) {
    %c0_i32 = arith.constant 0 : i32
    %c0_i32_0 = arith.constant 0 : i32
    return %arg0, %c0_i32 : i32, i32
  }
  func.func @transform_3(%arg0: i32) -> (i32, i32) {
    %c0_i32 = arith.constant 0 : i32
    %c0_i32_0 = arith.constant 0 : i32
    %c0_i32_1 = arith.constant 0 : i32
    return %c0_i32, %c0_i32_0 : i32, i32
  }
  func.func @transform_4(%arg0: i32) -> (i32, i32) {
    %c0_i32 = arith.constant 0 : i32
    %c0_i32_0 = arith.constant 0 : i32
    return %arg0, %c0_i32 : i32, i32
  }
}

</mosaic_0001>

<llo_original>
// kernel: tpu_custom_call.1
$region0: #{tpu_custom_call.1}
  #allocation0 [shape = 'u32[]', space=smem, size = 0x4, offset = 0x4, fixed_abs, tag = 'smem constant byte address 0x4 - core index']
  #allocation1 [shape = 'u32[144,128]{1,0:T(1,128)}', space=vmem, size = 0x12000, scoped, tag = 'internal scratch']
  %s0 = inlined_call_operand.vmem [shape: f32[16,16], index: 0, kind: input, shape index: {}]
  %s1 = inlined_call_operand.vmem [shape: f32[1,16], index: 1, kind: input, shape index: {}]
  %s2 = inlined_call_operand.vmem [shape: f32[16,1], index: 2, kind: input, shape index: {}]
  %s3 = inlined_call_operand.vmem [shape: f32[1,2], index: 3, kind: input, shape index: {}]
  %s4 = inlined_call_operand.vmem [shape: f32[16,2], index: 4, kind: output, shape index: {}]
  %s5 = sld [smem:[#allocation0]]
  $region30: #{tpu_custom_call.1} parent=0
    _
  %s7 = ssub.s32 1, %s5
  %s8 = scalar_select 0, %s7, %s5
  $region1: #{tpu_custom_call.1} parent=0
    #allocation2 [shape = 'u8[512]{0}', space=smem, size = 0x200, scoped, tag = 'input window, operand 3, single buffered']
    #allocation3 [shape = 's32[1]{0}', space=sflag, size = 0x4, scoped, tag = 'scoped memory for tpu_custom_call.1']
    %9 = vsyncpa [#allocation3], 0
    // Predicated region
    $region2: #{tpu_custom_call.1} parent=1 // pred_check
      _
    $region3: #{tpu_custom_call.1} parent=1 // pred_check_branch
      %11 = sbr.rel (0) target = $region5
    $region4: #{tpu_custom_call.1} parent=1 // pred_region
      _
    $region5: #{tpu_custom_call.1} parent=1 // pred_fallthru
      _
    // Predicated region
    $region6: #{tpu_custom_call.1} parent=1 // pred_check
      _
    $region7: #{tpu_custom_call.1} parent=1 // pred_check_branch
      %13 = sbr.rel (0) target = $region9
    $region8: #{tpu_custom_call.1} parent=1 // pred_region
      _
    $region9: #{tpu_custom_call.1} parent=1 // pred_fallthru
      _
    // Predicated region
    $region10: #{tpu_custom_call.1} parent=1 // pred_check
      _
    $region11: #{tpu_custom_call.1} parent=1 // pred_check_branch
      %15 = sbr.rel (0) target = $region13
    $region12: #{tpu_custom_call.1} parent=1 // pred_region
      _
    $region13: #{tpu_custom_call.1} parent=1 // pred_fallthru
      _
    // Predicated region
    $region14: #{tpu_custom_call.1} parent=1 // pred_check
      _
    $region15: #{tpu_custom_call.1} parent=1 // pred_check_branch
      %17 = sbr.rel (0) target = $region17
    $region16: #{tpu_custom_call.1} parent=1 // pred_region
      %s19 = ssub.s32 16, 16
      %20 = vsyncadd [#allocation3], %s19
      %s22 = sshll.u32 %s3, 4
      %s23 = int_to_ptr.vmem [resolvable:$true] %s22
      %25 = dma.vmem_to_smem %s23, 16, [#allocation2], [#allocation3]
    $region17: #{tpu_custom_call.1} parent=1 // pred_fallthru
      _
    // Predicated region
    $region18: #{tpu_custom_call.1} parent=1 // pred_check
      _
    $region19: #{tpu_custom_call.1} parent=1 // pred_check_branch
      %27 = sbr.rel (0) target = $region21
    $region20: #{tpu_custom_call.1} parent=1 // pred_region
      %28 = dma.done [#allocation3], 16
    $region21: #{tpu_custom_call.1} parent=1 // pred_fallthru
      _
    %29 = sfence
    %v30 = vld [vmem:[%s0] sm:$0xff]
    %v31 = vld [vmem:[%s0 + $0x8] sm:$0xff]
    %v32 = vld [vmem:[%s2] sm:$0xff]
    %v33 = vld [vmem:[%s2 + $0x8] sm:$0xff]
    %v34 = vld [vmem:[%s1] sm:$0x1]
    %vm35 = vcmask 130048
    %v36 = vsel %vm35, %v30, 0.0
    %37 = vadd.xlane.f32.xlu0 %v36
    %v38 = vpop.xlane.xlu0 %37
    %v39 = vsel %vm35, %v31, 0.0
    %40 = vadd.xlane.f32.xlu0 %v39
    %v41 = vpop.xlane.xlu0 %40
    %v42 = vrcp.pop 16.0
    %v43 = vmul.f32 %v38, %v42
    %v44 = vmul.f32 %v41, %v42
    %v45 = vsub.f32 %v30, %v43
    %v46 = vsub.f32 %v31, %v44
    %v47 = vmul.f32 %v45, %v45
    %v48 = vmul.f32 %v46, %v46
    %v49 = vsel %vm35, %v47, 0.0
    %50 = vadd.xlane.f32.xlu0 %v49
    %v51 = vpop.xlane.xlu0 %50
    %v52 = vsel %vm35, %v48, 0.0
    %53 = vadd.xlane.f32.xlu0 %v52
    %v54 = vpop.xlane.xlu0 %53
    %v55 = vmul.f32 %v51, %v42
    %v56 = vmul.f32 %v54, %v42
    %vm57 = vcmp.gt.f32.partialorder %v32, 0.0
    %vm58 = vcmp.gt.f32.partialorder %v33, 0.0
    %v59 = vrsqrt.pop %v55
    %v60 = vrsqrt.pop %v56
    %v61 = vmul.f32 %v45, %v59
    %v62 = vmul.f32 %v46, %v60
    %v63 = vsel %vm57, 1, 0
    %v64 = vsel %vm58, 1, 0
    %65 = vset.pattern.permute.xlu0 0
    %66 = vperm.xlu0 %65, %v63
    %v67 = vpop.permute.xlu0 %66
    %68 = vset.pattern.permute.xlu0 0
    %69 = vperm.xlu0 %68, %v64
    %v70 = vpop.permute.xlu0 %69
    %vm71 = vcmp.eq.s32.totalorder %v67, 1
    %vm72 = vcmp.eq.s32.totalorder %v70, 1
    %v73 = vsel %vm71, %v61, %v30
    %v74 = vsel %vm72, %v62, %v31
    %vm75 = vweird.f32 %v73
    %vm76 = vweird.f32 %v74
    %vm77 = vmxor %vm75, 1
    %vm78 = vmxor %vm76, 1
    %v79 = vsel %vm77, %v73, 0.0
    %v80 = vsel %vm78, %v74, 0.0
    %s81 = sld [smem:[#allocation2]]
    %s82 = sld [smem:[#allocation2 + $0x1]]
    %v84 = vlaneseq
    %v85 = vshrl.u32 %v84, 7
    %v86 = vsub.s32 0, %v85
    %v87 = vrot.slane %v34, %v86
    %v89 = vmul.f32 %v79, %v87
    %v90 = vmul.f32 %v80, %v87
    %v91 = vsel %vm35, %v89, 0.0
    %92 = vadd.xlane.f32.xlu0 %v91
    %v93 = vpop.xlane.xlu0 %92
    %v94 = vsel %vm35, %v90, 0.0
    %95 = vadd.xlane.f32.xlu0 %v94
    %v96 = vpop.xlane.xlu0 %95
    %99 = vrot.lane.b32.xlu0 %v79, 113
    %v100 = vpop.permute.xlu0 %99
    %101 = vrot.lane.b32.xlu0 %v80, 113
    %v102 = vpop.permute.xlu0 %101
    %v105 = vmul.f32 %v32, %v100
    %v106 = vmul.f32 %v33, %v102
    %v107 = vstv %s82
    %v108 = vmul.f32 %v105, %v107
    %v109 = vmul.f32 %v106, %v107
    %v110 = vsub.f32 %v93, %v108
    %v111 = vsub.f32 %v96, %v109
    %v112 = vstv %s81
    %v113 = vadd.f32 %v110, %v112
    %v114 = vadd.f32 %v111, %v112
    %vm115 = vcmask 7168
    %116 = vst.msk [vmem:[%s4] sm:$0xff] %vm115, %v113
    %117 = vst.msk [vmem:[%s4 + $0x8] sm:$0xff] %vm115, %v114
    %118 = vrot.lane.b32.xlu0 %v79, 114
    %v119 = vpop.permute.xlu0 %118
    %120 = vrot.lane.b32.xlu0 %v80, 114
    %v121 = vpop.permute.xlu0 %120
    %vm124 = vcmask 15368
    %125 = vst.msk [vmem:[%s4] sm:$0xff] %vm124, %v119
    %126 = vst.msk [vmem:[%s4 + $0x8] sm:$0xff] %vm124, %v121
    // Predicated region
    $region22: #{tpu_custom_call.1} parent=1 // pred_check
      _
    $region23: #{tpu_custom_call.1} parent=1 // pred_check_branch
      %128 = sbr.rel (0) target = $region25
    $region24: #{tpu_custom_call.1} parent=1 // pred_region
      _
    $region25: #{tpu_custom_call.1} parent=1 // pred_fallthru
      _
    // Predicated region
    $region26: #{tpu_custom_call.1} parent=1 // pred_check
      _
    $region27: #{tpu_custom_call.1} parent=1 // pred_check_branch
      %130 = sbr.rel (0) target = $region29
    $region28: #{tpu_custom_call.1} parent=1 // pred_region
      _
    $region29: #{tpu_custom_call.1} parent=1 // pred_fallthru
      _
    %131 = vsyncpa [#allocation3], 1

</llo_original>
